<compile_context>
chip_gen: v7x
topology: tpu7x:2x2x1
jax: 0.10.0
libtpu: 0.0.40
codegen_flags: <defaults>
</compile_context>

<pallas_src>
import jax
import jax.numpy as jnp
from jax import lax
from jax.experimental import pallas as pl
from jax.experimental.pallas import tpu as pltpu


def _linear_t_kernel(x_ref, w_ref, b_ref, o_ref):
    """Computes o = W @ x_tile^T + b, stored transposed (lane axis = batch).

    x_ref: (TB, dim_in)        VMEM  - batch tile of inputs
    w_ref: (out_class, dim_in) VMEM  - weight in native PyTorch layout (grid-invariant)
    b_ref: (out_class,)        SMEM  - bias scalars
    o_ref: (out_class, TB)     VMEM  - transposed output tile
    """
    # Single MXU matmul contracting the feature dim of both operands (A @ B^T form),
    # f32 accumulation. Result shape (out_class, TB): batch lives on the lane axis.
    acc = lax.dot_general(
        w_ref[...], x_ref[...],
        dimension_numbers=(((1,), (1,)), ((), ())),
        preferred_element_type=jnp.float32,
    )
    # Add bias per output row (out_class is tiny & static); scalar comes from SMEM,
    # broadcast along the 128-wide lane axis. Stores stay lane-dense.
    out_class = o_ref.shape[0]
    for c in range(out_class):
        o_ref[c:c + 1, :] = (acc[c:c + 1, :] + b_ref[c]).astype(o_ref.dtype)


def mlp_model_10_forward(ev, weight, bias, *, tb=None):
    """Forward pass of MLPmodel_10 (y = ev @ W^T + b).

    ev:     (B, dim_in)          f32
    weight: (out_class, dim_in)  f32  (PyTorch nn.Linear layout)
    bias:   (out_class,)         f32
    Returns (B, out_class).
    """
    B, dim_in = ev.shape
    out_class = weight.shape[0]

    # Batch tile: whole batch if small, else 512 rows (>= measured knee for HBM roofline,
    # tiny VMEM footprint). tb must be a multiple of 128 (lane-aligned transposed output)
    # or equal to B.
    if tb is None:
        tb = B if B <= 512 else 512
    tb = min(tb, B)
    if tb != B and tb % 128 != 0:
        raise ValueError("tb must equal B or be a multiple of 128 for lane-dense output")

    grid = (pl.cdiv(B, tb),)

    out_t = pl.pallas_call(
        _linear_t_kernel,
        out_shape=jax.ShapeDtypeStruct((out_class, B), ev.dtype),
        grid_spec=pl.GridSpec(
            grid=grid,
            in_specs=[
                pl.BlockSpec((tb, dim_in), lambda i: (i, 0)),          # x batch tile
                pl.BlockSpec((out_class, dim_in), lambda i: (0, 0)),   # W, grid-invariant
                pl.BlockSpec(memory_space=pltpu.MemorySpace.SMEM),     # bias scalars
            ],
            out_specs=pl.BlockSpec((out_class, tb), lambda i: (0, i)),  # y^T tile
        ),
        compiler_params=pltpu.CompilerParams(
            dimension_semantics=("parallel",),   # batch axis is independent
        ),
    )(ev, weight, bias)

    # Layout plumbing back to PyTorch's (B, out_class); tiny (2, B) transpose in XLA.
    return out_t.T


if __name__ == "__main__":
    # hp['num_classes'] = 16 -> dim_in = 32, out_class = 2
    num_classes = 16
    dim_in = num_classes * 2
    out_class = 2
    batch = 256            # small, but larger than the tile so the batch grid is exercised

    key = jax.random.PRNGKey(0)
    k_x, k_w, k_b = jax.random.split(key, 3)

    ev = jax.random.normal(k_x, (batch, dim_in), dtype=jnp.float32)

    # Deterministic parameter init (mimics PyTorch Linear uniform init bounds),
    # kept in PyTorch's native (out_class, dim_in) layout.
    bound = 1.0 / (dim_in ** 0.5)
    weight = jax.random.uniform(k_w, (out_class, dim_in), jnp.float32, -bound, bound)
    bias = jax.random.uniform(k_b, (out_class,), jnp.float32, -bound, bound)

    out = mlp_model_10_forward(ev, weight, bias, tb=128)   # grid=(2,), pipelined batch tiles
    out = jax.block_until_ready(out)

    # Correctness check against plain JAX reference of the PyTorch forward.
    ref = ev @ weight.T + bias
    assert out.shape == (batch, out_class)
    assert jnp.allclose(out, ref, atol=1e-5, rtol=1e-5), "mismatch vs reference"

    print("KERNEL_OK")
</pallas_src>

<mosaic_0001>
module attributes {stable_mosaic.version = 11 : i64} {
  func.func @_linear_t_kernel(%arg0: i32, %arg1: memref<128x32xf32, #tpu.memory_space<vmem>>, %arg2: memref<2x32xf32, #tpu.memory_space<vmem>>, %arg3: memref<2xf32, #tpu.memory_space<smem>>, %arg4: memref<2x128xf32, #tpu.memory_space<vmem>>) attributes {dimension_semantics = [#tpu.dimension_semantics<parallel>], iteration_bounds = array<i64: 2>, scalar_prefetch = 0 : i64, scratch_operands = 0 : i64, tpu.core_type = #tpu.core_type<tc>, window_params = [{transform_indices = @transform_0, window_bounds = array<i64: 128, 32>}, {pipeline_mode = #tpu.pipeline_mode<synchronous>, transform_indices = @transform_1, window_bounds = array<i64: 2, 32>}, {transform_indices = @transform_2, window_bounds = array<i64: 2>}, {transform_indices = @transform_3, window_bounds = array<i64: 2, 128>}]} {
    %c0 = arith.constant 0 : index
    %c0_0 = arith.constant 0 : index
    %0 = vector.load %arg2[%c0, %c0_0] : memref<2x32xf32, #tpu.memory_space<vmem>>, vector<2x32xf32>
    %c0_1 = arith.constant 0 : index
    %c0_2 = arith.constant 0 : index
    %1 = vector.load %arg1[%c0_1, %c0_2] : memref<128x32xf32, #tpu.memory_space<vmem>>, vector<128x32xf32>
    %cst = arith.constant dense<0.000000e+00> : vector<2x128xf32>
    %2 = tpu.matmul %0, %1, %cst {dimension_numbers = #tpu.dot_dimension_numbers<[1], [1], [0], [0], [0, 0, 1, 0], [], []>} : vector<2x32xf32>, vector<128x32xf32>, vector<2x128xf32> -> vector<2x128xf32>
    %3 = vector.extract_strided_slice %2 {offsets = [0, 0], sizes = [1, 128], strides = [1, 1]} : vector<2x128xf32> to vector<1x128xf32>
    %c0_3 = arith.constant 0 : index
    %4 = memref.load %arg3[%c0_3] : memref<2xf32, #tpu.memory_space<smem>>
    %5 = vector.broadcast %4 : f32 to vector<1x128xf32>
    %6 = arith.addf %3, %5 : vector<1x128xf32>
    %c0_4 = arith.constant 0 : index
    %c0_5 = arith.constant 0 : index
    %7 = vector.load %arg4[%c0_4, %c0_5] : memref<2x128xf32, #tpu.memory_space<vmem>>, vector<1x128xf32>
    tpu.vector_store %arg4[%c0_4, %c0_5], %6 {strides = array<i32>} : memref<2x128xf32, #tpu.memory_space<vmem>>, vector<1x128xf32>,
    %8 = vector.extract_strided_slice %2 {offsets = [1, 0], sizes = [1, 128], strides = [1, 1]} : vector<2x128xf32> to vector<1x128xf32>
    %c1 = arith.constant 1 : index
    %9 = memref.load %arg3[%c1] : memref<2xf32, #tpu.memory_space<smem>>
    %10 = vector.broadcast %9 : f32 to vector<1x128xf32>
    %11 = arith.addf %8, %10 : vector<1x128xf32>
    %c1_6 = arith.constant 1 : index
    %c0_7 = arith.constant 0 : index
    %12 = vector.load %arg4[%c1_6, %c0_7] : memref<2x128xf32, #tpu.memory_space<vmem>>, vector<1x128xf32>
    tpu.vector_store %arg4[%c1_6, %c0_7], %11 {strides = array<i32>} : memref<2x128xf32, #tpu.memory_space<vmem>>, vector<1x128xf32>,
    return
  }
  func.func @transform_0(%arg0: i32) -> (i32, i32) {
    %c0_i32 = arith.constant 0 : i32
    %c0_i32_0 = arith.constant 0 : i32
    return %arg0, %c0_i32 : i32, i32
  }
  func.func @transform_1(%arg0: i32) -> (i32, i32) {
    %c0_i32 = arith.constant 0 : i32
    %c0_i32_0 = arith.constant 0 : i32
    %c0_i32_1 = arith.constant 0 : i32
    return %c0_i32, %c0_i32_0 : i32, i32
  }
  func.func @transform_2(%arg0: i32) -> i32 {
    %c0_i32 = arith.constant 0 : i32
    %c0_i32_0 = arith.constant 0 : i32
    return %c0_i32 : i32
  }
  func.func @transform_3(%arg0: i32) -> (i32, i32) {
    %c0_i32 = arith.constant 0 : i32
    %c0_i32_0 = arith.constant 0 : i32
    return %c0_i32, %arg0 : i32, i32
  }
}

</mosaic_0001>

<llo_original>
// kernel: tpu_custom_call.1
$region0: #{tpu_custom_call.1}
  #allocation0 [shape = 'u32[]', space=smem, size = 0x4, offset = 0x4, fixed_abs, tag = 'smem constant byte address 0x4 - core index']
  #allocation1 [shape = 'u32[144,128]{1,0:T(1,128)}', space=vmem, size = 0x12000, scoped, tag = 'internal scratch']
  %s0 = inlined_call_operand.vmem [shape: f32[256,32], index: 0, kind: input, shape index: {}]
  %s1 = inlined_call_operand.vmem [shape: f32[2,32], index: 1, kind: input, shape index: {}]
  %s2 = inlined_call_operand.vmem [shape: f32[2], index: 2, kind: input, shape index: {}]
  %s3 = inlined_call_operand.hbm [shape: f32[2,256], index: 3, kind: output, shape index: {}]
  %s4 = sld [smem:[#allocation0]]
  $region49: #{tpu_custom_call.1} parent=0
    _
  %s6 = ssub.s32 1, %s4
  %s7 = scalar_select 0, %s6, %s4
  $region1: #{tpu_custom_call.1} parent=0
    #allocation2 [shape = 'u8[512]{0}', space=smem, size = 0x200, scoped, tag = 'input window, operand 2, single buffered']
    #allocation3 [shape = 's32[2]{0}', space=sflag, size = 0x8, scoped, tag = 'scoped memory for tpu_custom_call.1']
    #allocation4 [shape = 's32[2]{0}', space=sflag, size = 0x8, scoped, tag = 'scoped memory for tpu_custom_call.1']
    #allocation5 [shape = 'u8[2048]{0}', space=vmem, size = 0x800, scoped, tag = 'output window, operand 0']
    %8 = vsyncpa [#allocation4], 0
    %9 = vsyncpa [#allocation3], 0
    %s10 = scalar_lea.sflag [#allocation3], 1
    %11 = vsyncpa %s10, 0
    loop: start=0, step=1, limit=4
    $region2: #{tpu_custom_call.1} parent=1 // loop_pre_header
      _
    $region3: #{tpu_custom_call.1} parent=1 // loop_header
      %s13 = sphi 0, %s17
      %p14 = scmp.ge.s32.totalorder %s13, 4
      %s23 = sphi 0, %s25
      %s26 = sphi 0, %s23
      %s27 = sphi 0, %s26
      %s43 = sphi 0, %s27
      %s47 = sphi 0, %s47
      %s49 = sphi 0, %s47
      %s50 = sphi 0, %s49
      %s64 = sphi 0, %s50
      %s68 = sphi 0, %s68
      %s70 = sphi 0, %s68
      %s71 = sphi 0, %s70
      %s85 = sphi 0, %s71
      %s91 = sphi 0, %s93
      %s94 = sphi 0, %s91
      %s95 = sphi 0, %s94
      %s111 = sphi 0, %s95
    $region4: #{tpu_custom_call.1} parent=1 // loop_header_branch
      %16 = sbr.rel (%p14) target = $region8
    $region5: #{tpu_custom_call.1} parent=1 // loop_body
      %s18 = ssub.s32 %s13, 1
      %s19 = ssub.s32 %s13, 2
      %s20 = sadd.s32 %s13, 1
      %s21 = ssub.s32 %s13, %s20
      %p22 = scmp.eq.s32.totalorder %s21, 0
      %s24 = sadd.s32 %s23, 1
      %s25 = scalar_select %p22, %s23, %s24
      %p28 = pneg %p22
      %p29 = scmp.eq.s32.totalorder %s13, 1
      %p30 = por %p28, %p29
      %p31 = scmp.ne.s32.totalorder %s23, %s26
      %p32 = scmp.eq.s32.totalorder %s13, 0
      %p33 = por %p31, %p32
      %p34 = scmp.ne.s32.totalorder %s23, %s26
      %p35 = scmp.eq.s32.totalorder %s18, 1
      %p36 = por %p34, %p35
      %p37 = scmp.ne.s32.totalorder %s26, %s27
      %p38 = scmp.eq.s32.totalorder %s18, 0
      %p39 = por %p37, %p38
      %p40 = scmp.ne.s32.totalorder %s26, %s27
      %p41 = scmp.eq.s32.totalorder %s19, 1
      %p42 = por %p40, %p41
      %p44 = scmp.ne.s32.totalorder %s27, %s43
      %p45 = scmp.eq.s32.totalorder %s19, 0
      %p46 = por %p44, %p45
      %s48 = sadd.s32 %s47, 1
      %p51 = scmp.eq.s32.totalorder %s13, 1
      %p52 = scmp.ne.s32.totalorder %s47, %s49
      %p53 = scmp.eq.s32.totalorder %s13, 0
      %p54 = por %p52, %p53
      %p55 = scmp.ne.s32.totalorder %s47, %s49
      %p56 = scmp.eq.s32.totalorder %s18, 1
      %p57 = por %p55, %p56
      %p58 = scmp.ne.s32.totalorder %s49, %s50
      %p59 = scmp.eq.s32.totalorder %s18, 0
      %p60 = por %p58, %p59
      %p61 = scmp.ne.s32.totalorder %s49, %s50
      %p62 = scmp.eq.s32.totalorder %s19, 1
      %p63 = por %p61, %p62
      %p65 = scmp.ne.s32.totalorder %s50, %s64
      %p66 = scmp.eq.s32.totalorder %s19, 0
      %p67 = por %p65, %p66
      %s69 = sadd.s32 %s68, 1
      %p72 = scmp.eq.s32.totalorder %s13, 1
      %p73 = scmp.ne.s32.totalorder %s68, %s70
      %p74 = scmp.eq.s32.totalorder %s13, 0
      %p75 = por %p73, %p74
      %p76 = scmp.ne.s32.totalorder %s68, %s70
      %p77 = scmp.eq.s32.totalorder %s18, 1
      %p78 = por %p76, %p77
      %p79 = scmp.ne.s32.totalorder %s70, %s71
      %p80 = scmp.eq.s32.totalorder %s18, 0
      %p81 = por %p79, %p80
      %p82 = scmp.ne.s32.totalorder %s70, %s71
      %p83 = scmp.eq.s32.totalorder %s19, 1
      %p84 = por %p82, %p83
      %p86 = scmp.ne.s32.totalorder %s71, %s85
      %p87 = scmp.eq.s32.totalorder %s19, 0
      %p88 = por %p86, %p87
      %s89 = ssub.s32 %s13, %s20
      %p90 = scmp.eq.s32.totalorder %s89, 0
      %s92 = sadd.s32 %s91, 1
      %s93 = scalar_select %p90, %s91, %s92
      %p96 = pneg %p90
      %p97 = scmp.eq.s32.totalorder %s13, 1
      %p98 = por %p96, %p97
      %p99 = scmp.ne.s32.totalorder %s91, %s94
      %p100 = scmp.eq.s32.totalorder %s13, 0
      %p101 = por %p99, %p100
      %p102 = scmp.ne.s32.totalorder %s91, %s94
      %p103 = scmp.eq.s32.totalorder %s18, 1
      %p104 = por %p102, %p103
      %p105 = scmp.ne.s32.totalorder %s94, %s95
      %p106 = scmp.eq.s32.totalorder %s18, 0
      %p107 = por %p105, %p106
      %p108 = scmp.ne.s32.totalorder %s94, %s95
      %p109 = scmp.eq.s32.totalorder %s19, 1
      %p110 = por %p108, %p109
      %p112 = scmp.ne.s32.totalorder %s95, %s111
      %p113 = scmp.eq.s32.totalorder %s19, 0
      %p114 = por %p112, %p113
      %p115 = scmp.le.s32.totalorder 1, %s13
      %p116 = scmp.lt.s32.totalorder %s13, 3
      %p117 = pnand %p115, %p116
      %p118 = pneg %p117
      // Predicated region
      $region9: #{tpu_custom_call.1} parent=5 // pred_check
        _
      $region10: #{tpu_custom_call.1} parent=5 // pred_check_branch
        %120 = sbr.rel (%p117) target = $region12
      $region11: #{tpu_custom_call.1} parent=5 // pred_region
        %s121 = ssub.s32 %s13, 1
        // Predicated region
        $region13: #{tpu_custom_call.1} parent=11 // pred_check
          %p122 = pneg %p60
        $region14: #{tpu_custom_call.1} parent=11 // pred_check_branch
          %124 = sbr.rel (%p122) target = $region16
        $region15: #{tpu_custom_call.1} parent=11 // pred_region
          _
        $region16: #{tpu_custom_call.1} parent=11 // pred_fallthru
          _
        // Predicated region
        $region17: #{tpu_custom_call.1} parent=11 // pred_check
          %p125 = pneg %p81
        $region18: #{tpu_custom_call.1} parent=11 // pred_check_branch
          %127 = sbr.rel (%p125) target = $region20
        $region19: #{tpu_custom_call.1} parent=11 // pred_region
          %s129 = ssub.s32 16, 16
          %130 = vsyncadd [#allocation4], %s129
          %s132 = sshll.u32 %s2, 4
          %s133 = int_to_ptr.vmem [resolvable:$true] %s132
          %135 = dma.vmem_to_smem %s133, 16, [#allocation2], [#allocation4]
        $region20: #{tpu_custom_call.1} parent=11 // pred_fallthru
          _
      $region12: #{tpu_custom_call.1} parent=5 // pred_fallthru
        _
      %p136 = scmp.lt.s32.totalorder %s13, 2
      // Predicated region
      $region21: #{tpu_custom_call.1} parent=5 // pred_check
        %p137 = pneg %p136
      $region22: #{tpu_custom_call.1} parent=5 // pred_check_branch
        %139 = sbr.rel (%p137) target = $region24
      $region23: #{tpu_custom_call.1} parent=5 // pred_region
        // Predicated region
        $region25: #{tpu_custom_call.1} parent=23 // pred_check
          %p140 = pneg %p33
        $region26: #{tpu_custom_call.1} parent=23 // pred_check_branch
          %142 = sbr.rel (%p140) target = $region28
        $region27: #{tpu_custom_call.1} parent=23 // pred_region
          %s143 = smul.u32 16, %s13
          %p144 = scmp.lt.s32.totalorder %s143, 31
          %s145 = scalar_select %p144, %s143, 31
          %s146 = smul.addr %s145, 8
          %s147 = scalar_lea.vmem %s0, %s146
          %s148 = smul.u32 16, %s13
        $region28: #{tpu_custom_call.1} parent=23 // pred_fallthru
          _
      $region24: #{tpu_custom_call.1} parent=5 // pred_fallthru
        _
      %p149 = scmp.le.s32.totalorder 1, %s13
      %p150 = scmp.lt.s32.totalorder %s13, 3
      %p151 = pnand %p149, %p150
      %p152 = pneg %p151
      // Predicated region
      $region29: #{tpu_custom_call.1} parent=5 // pred_check
        _
      $region30: #{tpu_custom_call.1} parent=5 // pred_check_branch
        %154 = sbr.rel (%p151) target = $region32
      $region31: #{tpu_custom_call.1} parent=5 // pred_region
        %s155 = ssub.s32 %s13, 1
        // Predicated region
        $region33: #{tpu_custom_call.1} parent=31 // pred_check
          %p156 = pneg %p81
        $region34: #{tpu_custom_call.1} parent=31 // pred_check_branch
          %158 = sbr.rel (%p156) target = $region36
        $region35: #{tpu_custom_call.1} parent=31 // pred_region
          %159 = dma.done [#allocation4], 16
        $region36: #{tpu_custom_call.1} parent=31 // pred_fallthru
          _
        %160 = sfence
        %s161 = smul.u32 16, %s18
        %p162 = scmp.lt.s32.totalorder %s161, 31
        %s163 = scalar_select %p162, %s161, 31
        %s164 = smul.addr %s163, 8
        %s165 = scalar_lea.vmem %s0, %s164
        %p166 = pneg %p39
        %p167 = pneg %p36
        %p168 = pneg %p60
        %p169 = pneg %p57
        %p170 = pneg %p81
        %p171 = pneg %p78
        %p172 = pneg %p107
        %p173 = pneg %p104
        %s174 = sand.u32 %s94, 1
        %s175 = scalar_lea.sflag [#allocation3], %s174
        %s176 = sand.u32 %s94, 1
        %s177 = smul.addr %s176, 2
        %s178 = scalar_lea.vmem [#allocation5], %s177
        %s179 = smul.u32 16, %s18
        %p180 = scmp.lt.s32.totalorder %s179, 31
        %s181 = scalar_select %p180, %s179, 31
        %s182 = smul.addr %s181, 8
        %s183 = scalar_lea.vmem %s0, %s182
        %s184 = smul.u32 16, %s18
        %v185 = vld [vmem:[%s1] sm:$0x3]
        %v186 = vld [vmem:[%s183] sm:$0xff]
        %v187 = vld [vmem:[%s183 + $0x8] sm:$0xff]
        %v188 = vld [vmem:[%s183 + $0x10] sm:$0xff]
        %v189 = vld [vmem:[%s183 + $0x18] sm:$0xff]
        %v190 = vld [vmem:[%s183 + $0x20] sm:$0xff]
        %v191 = vld [vmem:[%s183 + $0x28] sm:$0xff]
        %v192 = vld [vmem:[%s183 + $0x30] sm:$0xff]
        %v193 = vld [vmem:[%s183 + $0x38] sm:$0xff]
        %v194 = vld [vmem:[%s183 + $0x40] sm:$0xff]
        %v195 = vld [vmem:[%s183 + $0x48] sm:$0xff]
        %v196 = vld [vmem:[%s183 + $0x50] sm:$0xff]
        %v197 = vld [vmem:[%s183 + $0x58] sm:$0xff]
        %v198 = vld [vmem:[%s183 + $0x60] sm:$0xff]
        %v199 = vld [vmem:[%s183 + $0x68] sm:$0xff]
        %v200 = vld [vmem:[%s183 + $0x70] sm:$0xff]
        %v201 = vld [vmem:[%s183 + $0x78] sm:$0xff]
        %vm202 = vcmask 261120
        %v204 = vsel %vm202, %v185, 0
        %v207 = vsel %vm202, %v186, 0
        %v210 = vsel %vm202, %v187, 0
        %v213 = vsel %vm202, %v188, 0
        %v216 = vsel %vm202, %v189, 0
        %v219 = vsel %vm202, %v190, 0
        %v222 = vsel %vm202, %v191, 0
        %v225 = vsel %vm202, %v192, 0
        %v228 = vsel %vm202, %v193, 0
        %v231 = vsel %vm202, %v194, 0
        %v234 = vsel %vm202, %v195, 0
        %v237 = vsel %vm202, %v196, 0
        %v240 = vsel %vm202, %v197, 0
        %v243 = vsel %vm202, %v198, 0
        %v246 = vsel %vm202, %v199, 0
        %v249 = vsel %vm202, %v200, 0
        %v252 = vsel %vm202, %v201, 0
        %254 = vmatprep.subr.mxu0 0.0
        %255 = vmatpush1.xpose.msra.mxu0 %v207
        %256 = vmatprep.subr.mxu0 0.0
        %257 = vmatpush1.xpose.msra.mxu0 %v210
        %258 = vmatprep.subr.mxu0 0.0
        %259 = vmatpush1.xpose.msra.mxu0 %v213
        %260 = vmatprep.subr.mxu0 0.0
        %261 = vmatpush1.xpose.msra.mxu0 %v216
        %262 = vmatprep.subr.mxu0 0.0
        %263 = vmatpush1.xpose.msra.mxu0 %v219
        %264 = vmatprep.subr.mxu0 0.0
        %265 = vmatpush1.xpose.msra.mxu0 %v222
        %266 = vmatprep.subr.mxu0 0.0
        %267 = vmatpush1.xpose.msra.mxu0 %v225
        %268 = vmatprep.subr.mxu0 0.0
        %269 = vmatpush1.xpose.msra.mxu0 %v228
        %270 = vmatprep.subr.mxu0 0.0
        %271 = vmatpush1.xpose.msra.mxu0 %v231
        %272 = vmatprep.subr.mxu0 0.0
        %273 = vmatpush1.xpose.msra.mxu0 %v234
        %274 = vmatprep.subr.mxu0 0.0
        %275 = vmatpush1.xpose.msra.mxu0 %v237
        %276 = vmatprep.subr.mxu0 0.0
        %277 = vmatpush1.xpose.msra.mxu0 %v240
        %278 = vmatprep.subr.mxu0 0.0
        %279 = vmatpush1.xpose.msra.mxu0 %v243
        %280 = vmatprep.subr.mxu0 0.0
        %281 = vmatpush1.xpose.msra.mxu0 %v246
        %282 = vmatprep.subr.mxu0 0.0
        %283 = vmatpush1.xpose.msra.mxu0 %v249
        %284 = vmatprep.subr.mxu0 0.0
        %285 = vmatpush1.xpose.msra.mxu0 %v252
        %286 = vmatprep.subr.mxu0 0.0
        %287 = vmatpush1.xpose.msra.mxu0 0.0
        %288 = vmatprep.subr.mxu0 0.0
        %289 = vmatpush1.xpose.msra.mxu0 0.0
        %290 = vmatprep.subr.mxu0 0.0
        %291 = vmatpush1.xpose.msra.mxu0 0.0
        %292 = vmatprep.subr.mxu0 0.0
        %293 = vmatpush1.xpose.msra.mxu0 0.0
        %294 = vmatprep.subr.mxu0 0.0
        %295 = vmatpush1.xpose.msra.mxu0 0.0
        %296 = vmatprep.subr.mxu0 0.0
        %297 = vmatpush1.xpose.msra.mxu0 0.0
        %298 = vmatprep.subr.mxu0 0.0
        %299 = vmatpush1.xpose.msra.mxu0 0.0
        %300 = vmatprep.subr.mxu0 0.0
        %301 = vmatpush1.xpose.msra.mxu0 0.0
        %302 = vmatprep.subr.mxu0 0.0
        %303 = vmatpush1.xpose.msra.mxu0 0.0
        %304 = vmatprep.subr.mxu0 0.0
        %305 = vmatpush1.xpose.msra.mxu0 0.0
        %306 = vmatprep.subr.mxu0 0.0
        %307 = vmatpush1.xpose.msra.mxu0 0.0
        %308 = vmatprep.subr.mxu0 0.0
        %309 = vmatpush1.xpose.msra.mxu0 0.0
        %310 = vmatprep.subr.mxu0 0.0
        %311 = vmatpush1.xpose.msra.mxu0 0.0
        %312 = vmatprep.subr.mxu0 0.0
        %313 = vmatpush1.xpose.msra.mxu0 0.0
        %314 = vmatprep.subr.mxu0 0.0
        %315 = vmatpush1.xpose.msra.mxu0 0.0
        %316 = vmatprep.subr.mxu0 0.0
        %317 = vmatpush1.xpose.msra.mxu0 0.0
        %318 = vmatprep.mubr.f32.mxu0 0.0
        %319 = vmatmul.mubr.f32.gmra.mrb[0].mxu0 %v204
        %v320 = vpop.f32.mrb[0].mxu0
        %v321 = vadd.f32 0.0, %v320
        %v322 = vpop.f32.mrb[0].mxu0
        %323 = vdwg.mxu0
        %s324 = sld [smem:[#allocation2]]
        %v325 = vstv %s324
        %v326 = vadd.f32 %v321, %v325
        %327 = vst [vmem:[%s178] sm:$0x1] %v326
        %s328 = sld [smem:[#allocation2 + $0x1]]
        %v329 = vstv %s328
        %v330 = vadd.f32 %v321, %v329
        %331 = vst [vmem:[%s178] sm:$0x2] %v330
        %s332 = sand.u32 %s94, 1
        %s333 = scalar_lea.sflag [#allocation3], %s332
        %s334 = sand.u32 %s94, 1
        %s335 = smul.addr %s334, 2
        %s336 = scalar_lea.vmem [#allocation5], %s335
        // Predicated region
        $region37: #{tpu_custom_call.1} parent=31 // pred_check
          %p337 = pneg %p104
        $region38: #{tpu_custom_call.1} parent=31 // pred_check_branch
          %339 = sbr.rel (%p337) target = $region40
        $region39: #{tpu_custom_call.1} parent=31 // pred_region
          %s341 = ssub.s32 32, 32
          %342 = vsyncadd %s333, %s341
          %s343 = smul.addr %s18, 32
          %s344 = scalar_lea.hbm %s3, %s343
          %s346 = sshll.u32 %s336, 4
          %s347 = int_to_ptr.vmem [resolvable:$true] %s346
          %349 = dma.vmem_to_hbm [thread:$0]  %s347, 32, %s344, %s333
        $region40: #{tpu_custom_call.1} parent=31 // pred_fallthru
          _
      $region32: #{tpu_custom_call.1} parent=5 // pred_fallthru
        _
      %p350 = scmp.le.s32.totalorder 2, %s13
      // Predicated region
      $region41: #{tpu_custom_call.1} parent=5 // pred_check
        %p351 = pneg %p350
      $region42: #{tpu_custom_call.1} parent=5 // pred_check_branch
        %353 = sbr.rel (%p351) target = $region44
      $region43: #{tpu_custom_call.1} parent=5 // pred_region
        %s354 = ssub.s32 %s13, 2
        // Predicated region
        $region45: #{tpu_custom_call.1} parent=43 // pred_check
          %p355 = pneg %p110
        $region46: #{tpu_custom_call.1} parent=43 // pred_check_branch
          %357 = sbr.rel (%p355) target = $region48
        $region47: #{tpu_custom_call.1} parent=43 // pred_region
          %s358 = sand.u32 %s95, 1
          %s359 = scalar_lea.sflag [#allocation3], %s358
          %s360 = sand.u32 %s95, 1
          %s361 = smul.addr %s360, 2
          %s362 = scalar_lea.vmem [#allocation5], %s361
          %363 = dma.done %s359, 32
        $region48: #{tpu_custom_call.1} parent=43 // pred_fallthru
          _
      $region44: #{tpu_custom_call.1} parent=5 // pred_fallthru
        _
    $region6: #{tpu_custom_call.1} parent=1 // loop_footer
      %s17 = sadd.s32 1, %s13
    $region7: #{tpu_custom_call.1} parent=1 // loop_footer_branch
      %12 = sbr.rel target = $region3
    $region8: #{tpu_custom_call.1} parent=1 // loop_exit
      _
    %364 = vsyncpa [#allocation3], 1
    %s365 = scalar_lea.sflag [#allocation3], 1
    %366 = vsyncpa %s365, 1
    %367 = vsyncpa [#allocation4], 1
    %s368 = scalar_lea.sflag [#allocation4], 1
    %369 = vsyncpa %s368, 1

</llo_original>
